<compile_context>
chip_gen: v5e
topology: v5e:2x2
jax: 0.10.0
libtpu: 0.0.40
codegen_flags: <defaults>
</compile_context>

<pallas_src>
import functools

import jax
import jax.numpy as jnp
from jax.experimental import pallas as pl
from jax.experimental.pallas import tpu as pltpu

LANE = 128          # padded feature width DP is a multiple of this
SUBLANE_BF16 = 16   # bf16 packs 16 rows per sublane group -> batch tile multiple
MAX_TB = 512        # max batch rows per grid step (big tiles amortize step cost)


def _round_up(n, m):
    return ((n + m - 1) // m) * m


def _fused_mlp_kernel(x_ref, w_ref, b_ref, o_ref, *, n_layers, d_in):
    """relu(...relu(x @ W0 + b0)...) fully in VMEM; bf16 MXU, f32 accumulate.

    x_ref: (TB, d_in) f32     input activation tile (real, unpadded feature width)
    w_ref: (L, DP, DP) bf16   all layer weights (zero padded), VMEM resident
    b_ref: (L, 1, DP) f32     all layer biases  (zero padded), VMEM resident
    o_ref: (TB, DP) f32       final activation tile (lane-dense store)
    """
    # Layer 0: contract only over the real d_in rows of W0 (static ref slice,
    # zero cost) so x never has to be feature-padded on the host side.
    act_bf16 = x_ref[...].astype(jnp.bfloat16)
    w0 = w_ref[0, :d_in, :]
    acc = jnp.dot(act_bf16, w0, preferred_element_type=jnp.float32)
    act = jnp.maximum(acc + b_ref[0], 0.0)           # bias + ReLU in f32 (VPU)

    for l in range(1, n_layers):                      # static -> fully unrolled
        acc = jnp.dot(act.astype(jnp.bfloat16), w_ref[l],
                      preferred_element_type=jnp.float32)
        act = jnp.maximum(acc + b_ref[l], 0.0)

    o_ref[...] = act.astype(o_ref.dtype)


def init_params(dims, key):
    """Deterministic init matching nn.Linear: W_t (in, out), b (out,)."""
    params = []
    for i in range(len(dims) - 1):
        key, kw, kb = jax.random.split(key, 3)
        bound = 1.0 / jnp.sqrt(jnp.float32(dims[i]))
        w_t = jax.random.uniform(
            kw, (dims[i], dims[i + 1]), jnp.float32, -bound, bound)
        b = jax.random.uniform(kb, (dims[i + 1],), jnp.float32, -bound, bound)
        params.append((w_t, b))
    return params


def pack_params(params):
    """Pad every layer to a common lane-dense width DP and stack. Done ONCE.

    Weights are stored bf16 (MXU-native); biases stay f32 (added to the f32
    accumulator). Zero padding is exact: padded W rows/cols and bias are 0 and
    relu(0) = 0 propagates through the stack.
    """
    dims = [params[0][0].shape[0]] + [w.shape[1] for w, _ in params]
    DP = _round_up(max(dims), LANE)
    L = len(params)
    w_stack = jnp.zeros((L, DP, DP), jnp.bfloat16)
    b_stack = jnp.zeros((L, 1, DP), jnp.float32)
    for l, (w_t, b) in enumerate(params):
        di, do = w_t.shape
        w_stack = w_stack.at[l, :di, :do].set(w_t.astype(jnp.bfloat16))
        b_stack = b_stack.at[l, 0, :do].set(b)
    return w_stack, b_stack, dims


def _pick_batch_tile(B):
    """Batch rows per grid step (multiple of 16 for bf16 sublane packing)."""
    if B <= 64:
        return _round_up(B, SUBLANE_BF16)
    # Guarantee >= 2 grid steps so the parallel axis can be sharded across both
    # v7x TensorCores, while still filling up to MAX_TB rows per step.
    return min(MAX_TB, _round_up(pl.cdiv(B, 2), SUBLANE_BF16))


def backprop_network_forward(x, packed):
    """Fused forward of BackpropNetwork. x: (B, d_in) f32 -> (B, d_out) f32."""
    w_stack, b_stack, dims = packed
    B, d_in = x.shape
    assert d_in == dims[0]
    L, DP, _ = w_stack.shape
    d_out = dims[-1]

    TB = _pick_batch_tile(B)
    B_pad = _round_up(B, TB)
    if B_pad != B:
        # Batch-dim padding only (feature width stays d_in) -> tiny write.
        x_in = jnp.zeros((B_pad, d_in), x.dtype).at[:B].set(x)
    else:
        x_in = x

    grid = (B_pad // TB,)
    flops = 2 * B_pad * (d_in * DP + (L - 1) * DP * DP)
    bytes_accessed = (4 * B_pad * d_in       # x in (f32, unpadded features)
                      + 4 * B_pad * DP       # out (f32, lane-dense)
                      + 2 * L * DP * DP      # weights (bf16)
                      + 4 * L * DP)          # biases (f32)

    out_pad = pl.pallas_call(
        functools.partial(_fused_mlp_kernel, n_layers=L, d_in=d_in),
        out_shape=jax.ShapeDtypeStruct((B_pad, DP), x.dtype),
        grid=grid,
        in_specs=[
            pl.BlockSpec((TB, d_in), lambda i: (i, 0)),       # batch-tiled x
            pl.BlockSpec((L, DP, DP), lambda i: (0, 0, 0)),   # weights resident
            pl.BlockSpec((L, 1, DP), lambda i: (0, 0, 0)),    # biases resident
        ],
        out_specs=pl.BlockSpec((TB, DP), lambda i: (i, 0)),
        compiler_params=pltpu.CompilerParams(
            dimension_semantics=("parallel",)),
        cost_estimate=pl.CostEstimate(
            flops=flops, transcendentals=0, bytes_accessed=bytes_accessed),
    )(x_in, w_stack, b_stack)

    # NOTE: production consumers should read out_pad (lane-dense) directly and
    # use its first d_out columns; the slice below only matches the module's
    # (B, d_out) output contract for this test.
    return out_pad[:B, :d_out]


def reference_forward(x, params, use_bf16=False):
    act = x
    for w_t, b in params:
        if use_bf16:
            acc = jnp.dot(act.astype(jnp.bfloat16), w_t.astype(jnp.bfloat16),
                          preferred_element_type=jnp.float32)
        else:
            acc = act @ w_t
        act = jnp.maximum(acc + b, 0.0)
    return act


if __name__ == "__main__":
    dims = [32, 64, 64, 16]   # matches BackpropNetwork(dims)
    batch = 8

    key = jax.random.PRNGKey(0)
    key, kx = jax.random.split(key)
    x = jax.random.normal(kx, (batch, dims[0]), jnp.float32)
    params = init_params(dims, key)
    packed = pack_params(params)   # pad + stack (bf16 weights) once at init

    out = backprop_network_forward(x, packed)
    out = jax.block_until_ready(out)

    ref_bf16 = reference_forward(x, params, use_bf16=True)   # mirrors kernel math
    ref_f32 = reference_forward(x, params, use_bf16=False)   # module semantics

    assert out.shape == (batch, dims[-1])
    assert jnp.allclose(out, ref_bf16, atol=1e-3, rtol=1e-3)
    assert jnp.allclose(out, ref_f32, atol=3e-2, rtol=3e-2)

    print("KERNEL_OK")
</pallas_src>

<mosaic_0001>
module attributes {stable_mosaic.version = 11 : i64} {
  func.func @_fused_mlp_kernel(%arg0: i32, %arg1: memref<16x32xf32, #tpu.memory_space<vmem>>, %arg2: memref<3x128x128xbf16, #tpu.memory_space<vmem>>, %arg3: memref<3x1x128xf32, #tpu.memory_space<vmem>>, %arg4: memref<16x128xf32, #tpu.memory_space<vmem>>) attributes {dimension_semantics = [#tpu.dimension_semantics<parallel>], iteration_bounds = array<i64: 1>, scalar_prefetch = 0 : i64, scratch_operands = 0 : i64, tpu.core_type = #tpu.core_type<tc>, window_params = [{transform_indices = @transform_0, window_bounds = array<i64: 16, 32>}, {pipeline_mode = #tpu.pipeline_mode<synchronous>, transform_indices = @transform_1, window_bounds = array<i64: 3, 128, 128>}, {pipeline_mode = #tpu.pipeline_mode<synchronous>, transform_indices = @transform_2, window_bounds = array<i64: 3, 1, 128>}, {transform_indices = @transform_3, window_bounds = array<i64: 16, 128>}]} {
    %c0 = arith.constant 0 : index
    %c0_0 = arith.constant 0 : index
    %0 = vector.load %arg1[%c0, %c0_0] : memref<16x32xf32, #tpu.memory_space<vmem>>, vector<16x32xf32>
    %1 = arith.truncf %0 : vector<16x32xf32> to vector<16x32xbf16>
    %c0_1 = arith.constant 0 : index
    %c0_2 = arith.constant 0 : index
    %c0_3 = arith.constant 0 : index
    %2 = vector.load %arg2[%c0_1, %c0_2, %c0_3] : memref<3x128x128xbf16, #tpu.memory_space<vmem>>, vector<1x32x128xbf16>
    %3 = vector.shape_cast %2 : vector<1x32x128xbf16> to vector<32x128xbf16>
    %cst = arith.constant dense<0.000000e+00> : vector<16x128xf32>
    %4 = tpu.matmul %1, %3, %cst {dimension_numbers = #tpu.dot_dimension_numbers<[1], [0], [0], [1], [0, 0, 1, 1], [], []>} : vector<16x32xbf16>, vector<32x128xbf16>, vector<16x128xf32> -> vector<16x128xf32>
    %c0_4 = arith.constant 0 : index
    %c0_5 = arith.constant 0 : index
    %c0_6 = arith.constant 0 : index
    %5 = vector.load %arg3[%c0_4, %c0_5, %c0_6] : memref<3x1x128xf32, #tpu.memory_space<vmem>>, vector<1x1x128xf32>
    %6 = vector.shape_cast %5 : vector<1x1x128xf32> to vector<1x128xf32>
    %7 = vector.broadcast %6 : vector<1x128xf32> to vector<16x128xf32>
    %8 = arith.addf %4, %7 : vector<16x128xf32>
    %cst_7 = arith.constant 0.000000e+00 : f32
    %9 = vector.broadcast %cst_7 : f32 to vector<16x128xf32>
    %10 = arith.maximumf %8, %9 : vector<16x128xf32>
    %11 = arith.truncf %10 : vector<16x128xf32> to vector<16x128xbf16>
    %c1 = arith.constant 1 : index
    %c0_8 = arith.constant 0 : index
    %c0_9 = arith.constant 0 : index
    %12 = vector.load %arg2[%c1, %c0_8, %c0_9] : memref<3x128x128xbf16, #tpu.memory_space<vmem>>, vector<1x128x128xbf16>
    %13 = vector.shape_cast %12 : vector<1x128x128xbf16> to vector<128x128xbf16>
    %cst_10 = arith.constant dense<0.000000e+00> : vector<16x128xf32>
    %14 = tpu.matmul %11, %13, %cst_10 {dimension_numbers = #tpu.dot_dimension_numbers<[1], [0], [0], [1], [0, 0, 1, 1], [], []>} : vector<16x128xbf16>, vector<128x128xbf16>, vector<16x128xf32> -> vector<16x128xf32>
    %c1_11 = arith.constant 1 : index
    %c0_12 = arith.constant 0 : index
    %c0_13 = arith.constant 0 : index
    %15 = vector.load %arg3[%c1_11, %c0_12, %c0_13] : memref<3x1x128xf32, #tpu.memory_space<vmem>>, vector<1x1x128xf32>
    %16 = vector.shape_cast %15 : vector<1x1x128xf32> to vector<1x128xf32>
    %17 = vector.broadcast %16 : vector<1x128xf32> to vector<16x128xf32>
    %18 = arith.addf %14, %17 : vector<16x128xf32>
    %cst_14 = arith.constant 0.000000e+00 : f32
    %19 = vector.broadcast %cst_14 : f32 to vector<16x128xf32>
    %20 = arith.maximumf %18, %19 : vector<16x128xf32>
    %21 = arith.truncf %20 : vector<16x128xf32> to vector<16x128xbf16>
    %c2 = arith.constant 2 : index
    %c0_15 = arith.constant 0 : index
    %c0_16 = arith.constant 0 : index
    %22 = vector.load %arg2[%c2, %c0_15, %c0_16] : memref<3x128x128xbf16, #tpu.memory_space<vmem>>, vector<1x128x128xbf16>
    %23 = vector.shape_cast %22 : vector<1x128x128xbf16> to vector<128x128xbf16>
    %cst_17 = arith.constant dense<0.000000e+00> : vector<16x128xf32>
    %24 = tpu.matmul %21, %23, %cst_17 {dimension_numbers = #tpu.dot_dimension_numbers<[1], [0], [0], [1], [0, 0, 1, 1], [], []>} : vector<16x128xbf16>, vector<128x128xbf16>, vector<16x128xf32> -> vector<16x128xf32>
    %c2_18 = arith.constant 2 : index
    %c0_19 = arith.constant 0 : index
    %c0_20 = arith.constant 0 : index
    %25 = vector.load %arg3[%c2_18, %c0_19, %c0_20] : memref<3x1x128xf32, #tpu.memory_space<vmem>>, vector<1x1x128xf32>
    %26 = vector.shape_cast %25 : vector<1x1x128xf32> to vector<1x128xf32>
    %27 = vector.broadcast %26 : vector<1x128xf32> to vector<16x128xf32>
    %28 = arith.addf %24, %27 : vector<16x128xf32>
    %cst_21 = arith.constant 0.000000e+00 : f32
    %29 = vector.broadcast %cst_21 : f32 to vector<16x128xf32>
    %30 = arith.maximumf %28, %29 : vector<16x128xf32>
    %c0_22 = arith.constant 0 : index
    %c0_23 = arith.constant 0 : index
    %31 = vector.load %arg4[%c0_22, %c0_23] : memref<16x128xf32, #tpu.memory_space<vmem>>, vector<16x128xf32>
    tpu.vector_store %arg4[%c0_22, %c0_23], %30 {strides = array<i32>} : memref<16x128xf32, #tpu.memory_space<vmem>>, vector<16x128xf32>,
    return
  }
  func.func @transform_0(%arg0: i32) -> (i32, i32) {
    %c0_i32 = arith.constant 0 : i32
    %c0_i32_0 = arith.constant 0 : i32
    return %arg0, %c0_i32 : i32, i32
  }
  func.func @transform_1(%arg0: i32) -> (i32, i32, i32) {
    %c0_i32 = arith.constant 0 : i32
    %c0_i32_0 = arith.constant 0 : i32
    %c0_i32_1 = arith.constant 0 : i32
    %c0_i32_2 = arith.constant 0 : i32
    return %c0_i32, %c0_i32_0, %c0_i32_1 : i32, i32, i32
  }
  func.func @transform_2(%arg0: i32) -> (i32, i32, i32) {
    %c0_i32 = arith.constant 0 : i32
    %c0_i32_0 = arith.constant 0 : i32
    %c0_i32_1 = arith.constant 0 : i32
    %c0_i32_2 = arith.constant 0 : i32
    return %c0_i32, %c0_i32_0, %c0_i32_1 : i32, i32, i32
  }
  func.func @transform_3(%arg0: i32) -> (i32, i32) {
    %c0_i32 = arith.constant 0 : i32
    %c0_i32_0 = arith.constant 0 : i32
    return %arg0, %c0_i32 : i32, i32
  }
}

</mosaic_0001>

<llo_original>
// kernel: tpu_custom_call.1
$region0: #{tpu_custom_call.1}
  #allocation0 [shape = 'u32[]', space=smem, size = 0x4, offset = 0x4, fixed_abs, tag = 'smem constant byte address 0x4 - core index']
  #allocation1 [shape = 'u32[72,128]{1,0:T(1,128)}', space=vmem, size = 0x9000, scoped, tag = 'internal scratch']
  %s0 = inlined_call_operand.hbm [shape: f32[16,32], index: 0, kind: input, shape index: {}]
  %s1 = inlined_call_operand.hbm [shape: bf16[3,128,128], index: 1, kind: input, shape index: {}]
  %s2 = inlined_call_operand.hbm [shape: f32[3,1,128], index: 2, kind: input, shape index: {}]
  %s3 = inlined_call_operand.hbm [shape: f32[16,128], index: 3, kind: output, shape index: {}]
  %s4 = sld [smem:[#allocation0]]
  $region34: #{tpu_custom_call.1} parent=0
    _
  %s6 = ssub.s32 1, %s4
  %s7 = scalar_select 0, %s6, %s4
  $region1: #{tpu_custom_call.1} parent=0
    #allocation2 [shape = 'u8[8192]{0}', space=vmem, size = 0x2000, scoped, tag = 'input window, operand 0, single buffered']
    #allocation3 [shape = 's32[1]{0}', space=sflag, size = 0x4, scoped, tag = 'scoped memory for tpu_custom_call.1']
    #allocation4 [shape = 's32[1]{0}', space=sflag, size = 0x4, scoped, tag = 'scoped memory for tpu_custom_call.1']
    #allocation5 [shape = 'u8[98304]{0}', space=vmem, size = 0x18000, scoped, tag = 'input window, operand 1, single buffered']
    #allocation6 [shape = 's32[1]{0}', space=sflag, size = 0x4, scoped, tag = 'scoped memory for tpu_custom_call.1']
    #allocation7 [shape = 'u8[1536]{0}', space=vmem, size = 0x800, scoped, tag = 'input window, operand 2, single buffered']
    #allocation8 [shape = 'u8[8192]{0}', space=vmem, size = 0x2000, scoped, tag = 'output window, operand 0, single buffered']
    %8 = vsyncpa [#allocation3], 0
    %9 = vsyncpa [#allocation6], 0
    %10 = vsyncpa [#allocation4], 0
    // Predicated region
    $region2: #{tpu_custom_call.1} parent=1 // pred_check
      _
    $region3: #{tpu_custom_call.1} parent=1 // pred_check_branch
      %12 = sbr.rel (0) target = $region5
    $region4: #{tpu_custom_call.1} parent=1 // pred_region
      %14 = vsyncadd [#allocation3], 0
      %s15 = sshll.u32 %s0, 4
      %s16 = int_to_ptr.hbm [resolvable:$true] %s15
      %s17 = sshll.u32 [#allocation2], 4
      %s18 = int_to_ptr.vmem [resolvable:$true] %s17
      %23 = dma.hbm_to_vmem [thread:$0]  %s16, 256, %s18, [#allocation3], 128, 128, 8
    $region5: #{tpu_custom_call.1} parent=1 // pred_fallthru
      _
    // Predicated region
    $region6: #{tpu_custom_call.1} parent=1 // pred_check
      _
    $region7: #{tpu_custom_call.1} parent=1 // pred_check_branch
      %25 = sbr.rel (0) target = $region9
    $region8: #{tpu_custom_call.1} parent=1 // pred_region
      %27 = vsyncadd [#allocation6], 0
      %s28 = sshll.u32 %s1, 4
      %s29 = int_to_ptr.hbm [resolvable:$true] %s28
      %s30 = sshll.u32 [#allocation5], 4
      %s31 = int_to_ptr.vmem [resolvable:$true] %s30
      %36 = dma.hbm_to_vmem [thread:$0]  %s29, 3072, %s31, [#allocation6], 64, 64, 4
    $region9: #{tpu_custom_call.1} parent=1 // pred_fallthru
      _
    // Predicated region
    $region10: #{tpu_custom_call.1} parent=1 // pred_check
      _
    $region11: #{tpu_custom_call.1} parent=1 // pred_check_branch
      %38 = sbr.rel (0) target = $region13
    $region12: #{tpu_custom_call.1} parent=1 // pred_region
      %40 = vsyncadd [#allocation6], 0
      %s41 = sshll.u32 %s2, 4
      %s42 = int_to_ptr.hbm [resolvable:$true] %s41
      %s43 = sshll.u32 [#allocation7], 4
      %s44 = int_to_ptr.vmem [resolvable:$true] %s43
      %49 = dma.hbm_to_vmem [thread:$0]  %s42, 48, %s44, [#allocation6], 16, 16, 1
    $region13: #{tpu_custom_call.1} parent=1 // pred_fallthru
      _
    // Predicated region
    $region14: #{tpu_custom_call.1} parent=1 // pred_check
      _
    $region15: #{tpu_custom_call.1} parent=1 // pred_check_branch
      %51 = sbr.rel (0) target = $region17
    $region16: #{tpu_custom_call.1} parent=1 // pred_region
      %53 = dma.done [#allocation3], 256
    $region17: #{tpu_custom_call.1} parent=1 // pred_fallthru
      _
    // Predicated region
    $region18: #{tpu_custom_call.1} parent=1 // pred_check
      _
    $region19: #{tpu_custom_call.1} parent=1 // pred_check_branch
      %55 = sbr.rel (0) target = $region21
    $region20: #{tpu_custom_call.1} parent=1 // pred_region
      %57 = dma.done [#allocation6], 3072
    $region21: #{tpu_custom_call.1} parent=1 // pred_fallthru
      _
    // Predicated region
    $region22: #{tpu_custom_call.1} parent=1 // pred_check
      _
    $region23: #{tpu_custom_call.1} parent=1 // pred_check_branch
      %59 = sbr.rel (0) target = $region25
    $region24: #{tpu_custom_call.1} parent=1 // pred_region
      %61 = dma.done [#allocation6], 48
    $region25: #{tpu_custom_call.1} parent=1 // pred_fallthru
      _
    %v63 = vld [vmem:[#allocation2] sm:$0xff]
    %v64 = vld [vmem:[#allocation2 + $0x8] sm:$0xff]
    %v65 = vpack.c.bf16 %v64, %v63
    %v66 = vld [vmem:[#allocation5] sm:$0xf]
    %v67 = vld [vmem:[#allocation5 + $0x4] sm:$0xf]
    %v68 = vld [vmem:[#allocation5 + $0x8] sm:$0xf]
    %v69 = vld [vmem:[#allocation5 + $0xc] sm:$0xf]
    %v70 = vld [vmem:[#allocation7] sm:$0x1]
    %v72 = vperm.slane %v70, 0
    %v78 = vunpack.c.l.b16 %v66
    %v79 = vunpack.c.l.b16 %v67
    %v80 = vunpack.c.l.b16 %v68
    %v81 = vunpack.c.l.b16 %v69
    %v82 = vpack.c.b16 %v79, %v78
    %v83 = vpack.c.b16 %v81, %v80
    %vm86 = vcmask 261120
    %v88 = vsel %vm86, %v65, 0
    %90 = vmatpush.bf16.msra.mxu0 0
    %91 = vmatpush.bf16.msra.mxu0 0
    %92 = vmatpush.bf16.msra.mxu0 0
    %93 = vmatpush.bf16.msra.mxu0 0
    %94 = vmatpush.bf16.msra.mxu0 0
    %95 = vmatpush.bf16.msra.mxu0 0
    %96 = vmatpush.bf16.msra.mxu0 %v83
    %97 = vmatpush.bf16.msra.mxu0 %v82
    %98 = vmatmul.bf16.gmra.mxu0 %v88
    %v99 = vpop.f32.mrf.mxu0
    %v100 = vadd.f32 %v72, %v99
    %v101 = vpop.f32.mrf.mxu0
    %v102 = vadd.f32 %v72, %v101
    %103 = vdwg.mxu0
    %v104 = vmax.f32 %v100, 0.0
    %v105 = vmax.f32 %v102, 0.0
    %v106 = vpack.c.bf16 %v105, %v104
    %s107 = scalar_lea.vmem [#allocation5], 64
    %v108 = vld [vmem:[%s107] sm:$0xf]
    %v109 = vld [vmem:[%s107 + $0x4] sm:$0xf]
    %v110 = vld [vmem:[%s107 + $0x8] sm:$0xf]
    %v111 = vld [vmem:[%s107 + $0xc] sm:$0xf]
    %v112 = vld [vmem:[%s107 + $0x10] sm:$0xf]
    %v113 = vld [vmem:[%s107 + $0x14] sm:$0xf]
    %v114 = vld [vmem:[%s107 + $0x18] sm:$0xf]
    %v115 = vld [vmem:[%s107 + $0x1c] sm:$0xf]
    %v116 = vld [vmem:[%s107 + $0x20] sm:$0xf]
    %v117 = vld [vmem:[%s107 + $0x24] sm:$0xf]
    %v118 = vld [vmem:[%s107 + $0x28] sm:$0xf]
    %v119 = vld [vmem:[%s107 + $0x2c] sm:$0xf]
    %v120 = vld [vmem:[%s107 + $0x30] sm:$0xf]
    %v121 = vld [vmem:[%s107 + $0x34] sm:$0xf]
    %v122 = vld [vmem:[%s107 + $0x38] sm:$0xf]
    %v123 = vld [vmem:[%s107 + $0x3c] sm:$0xf]
    %s124 = scalar_lea.vmem [#allocation7], 1
    %v125 = vld [vmem:[%s124] sm:$0x1]
    %v127 = vperm.slane %v125, 0
    %v145 = vunpack.c.l.b16 %v108
    %v146 = vunpack.c.l.b16 %v109
    %v147 = vunpack.c.l.b16 %v110
    %v148 = vunpack.c.l.b16 %v111
    %v149 = vunpack.c.l.b16 %v112
    %v150 = vunpack.c.l.b16 %v113
    %v151 = vunpack.c.l.b16 %v114
    %v152 = vunpack.c.l.b16 %v115
    %v153 = vunpack.c.l.b16 %v116
    %v154 = vunpack.c.l.b16 %v117
    %v155 = vunpack.c.l.b16 %v118
    %v156 = vunpack.c.l.b16 %v119
    %v157 = vunpack.c.l.b16 %v120
    %v158 = vunpack.c.l.b16 %v121
    %v159 = vunpack.c.l.b16 %v122
    %v160 = vunpack.c.l.b16 %v123
    %v161 = vpack.c.b16 %v146, %v145
    %v162 = vpack.c.b16 %v148, %v147
    %v163 = vpack.c.b16 %v150, %v149
    %v164 = vpack.c.b16 %v152, %v151
    %v165 = vpack.c.b16 %v154, %v153
    %v166 = vpack.c.b16 %v156, %v155
    %v167 = vpack.c.b16 %v158, %v157
    %v168 = vpack.c.b16 %v160, %v159
    %177 = vmatpush.bf16.msra.mxu0 %v168
    %178 = vmatpush.bf16.msra.mxu0 %v167
    %179 = vmatpush.bf16.msra.mxu0 %v166
    %180 = vmatpush.bf16.msra.mxu0 %v165
    %181 = vmatpush.bf16.msra.mxu0 %v164
    %182 = vmatpush.bf16.msra.mxu0 %v163
    %183 = vmatpush.bf16.msra.mxu0 %v162
    %184 = vmatpush.bf16.msra.mxu0 %v161
    %185 = vmatmul.bf16.gmra.mxu0 %v106
    %v186 = vpop.f32.mrf.mxu0
    %v187 = vadd.f32 %v127, %v186
    %v188 = vpop.f32.mrf.mxu0
    %v189 = vadd.f32 %v127, %v188
    %190 = vdwg.mxu0
    %v191 = vmax.f32 %v187, 0.0
    %v192 = vmax.f32 %v189, 0.0
    %v193 = vpack.c.bf16 %v192, %v191
    %s194 = scalar_lea.vmem [#allocation5], 128
    %v195 = vld [vmem:[%s194] sm:$0xf]
    %v196 = vld [vmem:[%s194 + $0x4] sm:$0xf]
    %v197 = vld [vmem:[%s194 + $0x8] sm:$0xf]
    %v198 = vld [vmem:[%s194 + $0xc] sm:$0xf]
    %v199 = vld [vmem:[%s194 + $0x10] sm:$0xf]
    %v200 = vld [vmem:[%s194 + $0x14] sm:$0xf]
    %v201 = vld [vmem:[%s194 + $0x18] sm:$0xf]
    %v202 = vld [vmem:[%s194 + $0x1c] sm:$0xf]
    %v203 = vld [vmem:[%s194 + $0x20] sm:$0xf]
    %v204 = vld [vmem:[%s194 + $0x24] sm:$0xf]
    %v205 = vld [vmem:[%s194 + $0x28] sm:$0xf]
    %v206 = vld [vmem:[%s194 + $0x2c] sm:$0xf]
    %v207 = vld [vmem:[%s194 + $0x30] sm:$0xf]
    %v208 = vld [vmem:[%s194 + $0x34] sm:$0xf]
    %v209 = vld [vmem:[%s194 + $0x38] sm:$0xf]
    %v210 = vld [vmem:[%s194 + $0x3c] sm:$0xf]
    %s211 = scalar_lea.vmem [#allocation7], 2
    %v212 = vld [vmem:[%s211] sm:$0x1]
    %v214 = vperm.slane %v212, 0
    %v232 = vunpack.c.l.b16 %v195
    %v233 = vunpack.c.l.b16 %v196
    %v234 = vunpack.c.l.b16 %v197
    %v235 = vunpack.c.l.b16 %v198
    %v236 = vunpack.c.l.b16 %v199
    %v237 = vunpack.c.l.b16 %v200
    %v238 = vunpack.c.l.b16 %v201
    %v239 = vunpack.c.l.b16 %v202
    %v240 = vunpack.c.l.b16 %v203
    %v241 = vunpack.c.l.b16 %v204
    %v242 = vunpack.c.l.b16 %v205
    %v243 = vunpack.c.l.b16 %v206
    %v244 = vunpack.c.l.b16 %v207
    %v245 = vunpack.c.l.b16 %v208
    %v246 = vunpack.c.l.b16 %v209
    %v247 = vunpack.c.l.b16 %v210
    %v248 = vpack.c.b16 %v233, %v232
    %v249 = vpack.c.b16 %v235, %v234
    %v250 = vpack.c.b16 %v237, %v236
    %v251 = vpack.c.b16 %v239, %v238
    %v252 = vpack.c.b16 %v241, %v240
    %v253 = vpack.c.b16 %v243, %v242
    %v254 = vpack.c.b16 %v245, %v244
    %v255 = vpack.c.b16 %v247, %v246
    %264 = vmatpush.bf16.msra.mxu0 %v255
    %265 = vmatpush.bf16.msra.mxu0 %v254
    %266 = vmatpush.bf16.msra.mxu0 %v253
    %267 = vmatpush.bf16.msra.mxu0 %v252
    %268 = vmatpush.bf16.msra.mxu0 %v251
    %269 = vmatpush.bf16.msra.mxu0 %v250
    %270 = vmatpush.bf16.msra.mxu0 %v249
    %271 = vmatpush.bf16.msra.mxu0 %v248
    %272 = vmatmul.bf16.gmra.mxu0 %v193
    %v273 = vpop.f32.mrf.mxu0
    %v274 = vadd.f32 %v214, %v273
    %v275 = vpop.f32.mrf.mxu0
    %v276 = vadd.f32 %v214, %v275
    %277 = vdwg.mxu0
    %v278 = vmax.f32 %v274, 0.0
    %v279 = vmax.f32 %v276, 0.0
    %280 = vst [vmem:[#allocation8] sm:$0xff] %v278
    %281 = vst [vmem:[#allocation8 + $0x8] sm:$0xff] %v279
    // Predicated region
    $region26: #{tpu_custom_call.1} parent=1 // pred_check
      _
    $region27: #{tpu_custom_call.1} parent=1 // pred_check_branch
      %283 = sbr.rel (0) target = $region29
    $region28: #{tpu_custom_call.1} parent=1 // pred_region
      %285 = vsyncadd [#allocation4], 0
      %s286 = sshll.u32 [#allocation8], 4
      %s287 = int_to_ptr.vmem [resolvable:$true] %s286
      %s288 = sshll.u32 %s3, 4
      %s289 = int_to_ptr.hbm [resolvable:$true] %s288
      %294 = dma.vmem_to_hbm [thread:$0]  %s287, 256, %s289, [#allocation4], 128, 128, 8
    $region29: #{tpu_custom_call.1} parent=1 // pred_fallthru
      _
    // Predicated region
    $region30: #{tpu_custom_call.1} parent=1 // pred_check
      _
    $region31: #{tpu_custom_call.1} parent=1 // pred_check_branch
      %296 = sbr.rel (0) target = $region33
    $region32: #{tpu_custom_call.1} parent=1 // pred_region
      %298 = dma.done [#allocation4], 256
    $region33: #{tpu_custom_call.1} parent=1 // pred_fallthru
      _
    %299 = vsyncpa [#allocation3], 1
    %300 = vsyncpa [#allocation6], 1
    %301 = vsyncpa [#allocation4], 1

</llo_original>
